<compile_context>
chip_gen: v5e
topology: v5e:2x2
jax: 0.10.0
libtpu: 0.0.40
codegen_flags: <defaults>
</compile_context>

<pallas_src>
import math

import jax
import jax.numpy as jnp
from jax.experimental import pallas as pl
from jax.experimental.pallas import tpu as pltpu

_TARGET_TILE_BYTES = 4 * 1024 * 1024      # ~4 MiB per buffer (4 live ~ 16 MiB)
_VMEM_LIMIT_BYTES = 32 * 1024 * 1024      # explicit (v5e scoped default is 16 MiB)
_SMALL_COPY_BYTES = 256 * 1024            # below this, plain XLA copy is faster


def _copy_kernel(x_ref, o_ref):
    # Straight VMEM passthrough of one lane-dense tile.
    o_ref[...] = x_ref[...]


def _sublane_multiple(itemsize):
    # Native packed tiling: (8,128) f32, (16,128) bf16/f16, (32,128) int8/fp8.
    return max(8, 32 // max(1, itemsize))


def _identity_copy_pallas(x):
    """Materialized identity copy via a pad-free, lane-dense Pallas kernel."""
    orig_shape = x.shape
    dtype = x.dtype
    total = int(math.prod(orig_shape)) if orig_shape else 1
    itemsize = jnp.dtype(dtype).itemsize

    if total == 0:
        # Zero-element tensor: nothing to copy (guards 0//0 in tiling math).
        return x

    # Widest lane-dense minor dim that divides the flat size exactly, so the
    # kernel needs no jnp.pad on input and no slice on output (each of those
    # would be a full extra HBM read+write of the tensor).
    lanes = None
    for cand in (1024, 512, 256, 128):
        if total % cand == 0:
            lanes = cand
            break
    if lanes is None:
        # Flat size not a multiple of 128: odd/tiny shape -> plain XLA copy.
        return jnp.copy(x)

    rows = total // lanes
    x2d = x.reshape(rows, lanes)

    # Tile sizing: ~4 MiB per buffer, dtype-aware sublane multiple.
    smul = _sublane_multiple(itemsize)
    tile_rows = _TARGET_TILE_BYTES // (lanes * itemsize)
    tile_rows = max(smul, (tile_rows // smul) * smul)

    if rows <= tile_rows:
        # Single block spanning the full row extent (full-dim blocks are
        # always layout-legal, no masking needed).
        tile_rows = rows
        grid = (1,)
    else:
        # Ragged last block handled by Pallas' implicit masking -- no padding.
        grid = (pl.cdiv(rows, tile_rows),)

    out = pl.pallas_call(
        _copy_kernel,
        out_shape=jax.ShapeDtypeStruct((rows, lanes), dtype),
        grid=grid,
        in_specs=[pl.BlockSpec((tile_rows, lanes), lambda i: (i, 0))],
        out_specs=pl.BlockSpec((tile_rows, lanes), lambda i: (i, 0)),
        compiler_params=pltpu.CompilerParams(
            dimension_semantics=("parallel",),
            vmem_limit_bytes=_VMEM_LIMIT_BYTES,
        ),
        cost_estimate=pl.CostEstimate(
            flops=0,
            transcendentals=0,
            bytes_accessed=2 * total * itemsize,
        ),
    )(x2d)

    return out.reshape(orig_shape)


def yournetstruct_forward(x, force_copy=False):
    """Pallas implementation of YourNetStruct.forward.

    forward(x) == x, so the default (and fastest) path performs no data
    movement at all.  Pass force_copy=True to get a materialized copy (tiny
    tensors use a plain XLA copy; larger ones run the Pallas copy kernel).
    """
    if not force_copy:
        # Optimal path: the identity requires no HBM traffic.
        return x
    total = int(math.prod(x.shape)) if x.shape else 1
    if total * jnp.dtype(x.dtype).itemsize < _SMALL_COPY_BYTES:
        # Fixed pallas_call dispatch dominates for tiny tensors.
        return jnp.copy(x)
    return _identity_copy_pallas(x)


if __name__ == "__main__":
    key = jax.random.PRNGKey(0)
    # Small NCHW input consistent with a conv-net style module signature.
    x = jax.random.normal(key, (2, 4, 16, 16), dtype=jnp.float32)

    # Fast path (no kernel launch).
    y_fast = yournetstruct_forward(x)
    y_fast = jax.block_until_ready(y_fast)
    assert y_fast.shape == x.shape and y_fast.dtype == x.dtype
    assert bool(jnp.all(y_fast == x))

    # force_copy wrapper (small tensor -> plain XLA copy path).
    y_copy = yournetstruct_forward(x, force_copy=True)
    y_copy = jax.block_until_ready(y_copy)
    assert y_copy.shape == x.shape and y_copy.dtype == x.dtype
    assert bool(jnp.all(y_copy == x))

    # Explicitly exercise the Pallas copy kernel (2048 elems -> (2, 1024)).
    y_pallas = _identity_copy_pallas(x)
    y_pallas = jax.block_until_ready(y_pallas)
    assert y_pallas.shape == x.shape and y_pallas.dtype == x.dtype
    assert bool(jnp.all(y_pallas == x))

    print("KERNEL_OK")
</pallas_src>

<mosaic_0001>
module attributes {stable_mosaic.version = 11 : i64} {
  func.func @_copy_kernel(%arg0: i32, %arg1: memref<2x1024xf32, #tpu.memory_space<vmem>>, %arg2: memref<2x1024xf32, #tpu.memory_space<vmem>>) attributes {dimension_semantics = [#tpu.dimension_semantics<parallel>], iteration_bounds = array<i64: 1>, scalar_prefetch = 0 : i64, scratch_operands = 0 : i64, tpu.core_type = #tpu.core_type<tc>, window_params = [{transform_indices = @transform_0, window_bounds = array<i64: 2, 1024>}, {transform_indices = @transform_1, window_bounds = array<i64: 2, 1024>}]} {
    %c0 = arith.constant 0 : index
    %c0_0 = arith.constant 0 : index
    %0 = vector.load %arg1[%c0, %c0_0] : memref<2x1024xf32, #tpu.memory_space<vmem>>, vector<2x1024xf32>
    %c0_1 = arith.constant 0 : index
    %c0_2 = arith.constant 0 : index
    %1 = vector.load %arg2[%c0_1, %c0_2] : memref<2x1024xf32, #tpu.memory_space<vmem>>, vector<2x1024xf32>
    tpu.vector_store %arg2[%c0_1, %c0_2], %0 {strides = array<i32>} : memref<2x1024xf32, #tpu.memory_space<vmem>>, vector<2x1024xf32>,
    return
  }
  func.func @transform_0(%arg0: i32) -> (i32, i32) {
    %c0_i32 = arith.constant 0 : i32
    %c0_i32_0 = arith.constant 0 : i32
    return %arg0, %c0_i32 : i32, i32
  }
  func.func @transform_1(%arg0: i32) -> (i32, i32) {
    %c0_i32 = arith.constant 0 : i32
    %c0_i32_0 = arith.constant 0 : i32
    return %arg0, %c0_i32 : i32, i32
  }
}

</mosaic_0001>

<llo_original>
// kernel: tpu_custom_call.1
$region0: #{tpu_custom_call.1}
  #allocation0 [shape = 'u32[]', space=smem, size = 0x4, offset = 0x4, fixed_abs, tag = 'smem constant byte address 0x4 - core index']
  #allocation1 [shape = 'u32[72,128]{1,0:T(1,128)}', space=vmem, size = 0x9000, scoped, tag = 'internal scratch']
  %s0 = inlined_call_operand.hbm [shape: f32[2,1024], index: 0, kind: input, shape index: {}]
  %s1 = inlined_call_operand.hbm [shape: f32[2,1024], index: 1, kind: output, shape index: {}]
  %s2 = sld [smem:[#allocation0]]
  $region18: #{tpu_custom_call.1} parent=0
    _
  %s4 = ssub.s32 1, %s2
  %s5 = scalar_select 0, %s4, %s2
  $region1: #{tpu_custom_call.1} parent=0
    #allocation2 [shape = 'u8[8192]{0}', space=vmem, size = 0x2000, scoped, tag = 'input window, operand 0, single buffered']
    #allocation3 [shape = 's32[1]{0}', space=sflag, size = 0x4, scoped, tag = 'scoped memory for tpu_custom_call.1']
    #allocation4 [shape = 's32[1]{0}', space=sflag, size = 0x4, scoped, tag = 'scoped memory for tpu_custom_call.1']
    #allocation5 [shape = 'u8[8192]{0}', space=vmem, size = 0x2000, scoped, tag = 'output window, operand 0, single buffered']
    %6 = vsyncpa [#allocation3], 0
    %7 = vsyncpa [#allocation4], 0
    // Predicated region
    $region2: #{tpu_custom_call.1} parent=1 // pred_check
      _
    $region3: #{tpu_custom_call.1} parent=1 // pred_check_branch
      %9 = sbr.rel (0) target = $region5
    $region4: #{tpu_custom_call.1} parent=1 // pred_region
      %11 = vsyncadd [#allocation3], 0
      %s13 = sshll.u32 %s0, 4
      %s14 = int_to_ptr.hbm [resolvable:$true] %s13
      %s15 = sshll.u32 [#allocation2], 4
      %s16 = int_to_ptr.vmem [resolvable:$true] %s15
      %18 = dma.hbm_to_vmem [thread:$0]  %s14, 256, %s16, [#allocation3]
    $region5: #{tpu_custom_call.1} parent=1 // pred_fallthru
      _
    // Predicated region
    $region6: #{tpu_custom_call.1} parent=1 // pred_check
      _
    $region7: #{tpu_custom_call.1} parent=1 // pred_check_branch
      %20 = sbr.rel (0) target = $region9
    $region8: #{tpu_custom_call.1} parent=1 // pred_region
      %22 = dma.done [#allocation3], 256
    $region9: #{tpu_custom_call.1} parent=1 // pred_fallthru
      _
    %v23 = vld [vmem:[#allocation2] sm:$0xff]
    %v24 = vld [vmem:[#allocation2 + $0x8] sm:$0xff]
    %25 = vst [vmem:[#allocation5] sm:$0xff] %v23
    %26 = vst [vmem:[#allocation5 + $0x8] sm:$0xff] %v24
    // Predicated region
    $region10: #{tpu_custom_call.1} parent=1 // pred_check
      _
    $region11: #{tpu_custom_call.1} parent=1 // pred_check_branch
      %28 = sbr.rel (0) target = $region13
    $region12: #{tpu_custom_call.1} parent=1 // pred_region
      %30 = vsyncadd [#allocation4], 0
      %s32 = sshll.u32 [#allocation5], 4
      %s33 = int_to_ptr.vmem [resolvable:$true] %s32
      %s34 = sshll.u32 %s1, 4
      %s35 = int_to_ptr.hbm [resolvable:$true] %s34
      %37 = dma.vmem_to_hbm [thread:$0]  %s33, 256, %s35, [#allocation4]
    $region13: #{tpu_custom_call.1} parent=1 // pred_fallthru
      _
    // Predicated region
    $region14: #{tpu_custom_call.1} parent=1 // pred_check
      _
    $region15: #{tpu_custom_call.1} parent=1 // pred_check_branch
      %39 = sbr.rel (0) target = $region17
    $region16: #{tpu_custom_call.1} parent=1 // pred_region
      %41 = dma.done [#allocation4], 256
    $region17: #{tpu_custom_call.1} parent=1 // pred_fallthru
      _
    %42 = vsyncpa [#allocation3], 1
    %43 = vsyncpa [#allocation4], 1

</llo_original>
